<compile_context>
chip_gen: v6e
topology: v6e:2x2x1
jax: 0.10.0
libtpu: 0.0.40
codegen_flags: <defaults>
</compile_context>

<pallas_src>
import jax
import jax.numpy as jnp
from jax.experimental import pallas as pl
from jax.experimental.pallas import tpu as pltpu

H1, H2 = 80, 10      # true hidden widths
P1, P2 = 128, 128    # lane-padded hidden widths


def _round_up(x, m):
    return ((x + m - 1) // m) * m


def _vmem_bytes(tb, dim, x_item, c_item):
    """Rough per-step VMEM footprint estimate for tile-size / limit sizing."""
    x_buf = 2 * tb * dim * x_item                       # double-buffered x stream
    acts = tb * (P1 + P2) * 4                           # f32 h1 + h2
    casts = tb * (dim + P1 + P2) * c_item               # compute-dtype MXU inputs
    wts = (dim * P1 + P1 * P2 + P2) * c_item + (P1 + P2 + 1) * 4
    out = 2 * tb * 4                                    # double-buffered (tb, 1) output
    return x_buf + acts + casts + wts + out


def _mlp_kernel(x_ref, w1_ref, b1_ref, w2_ref, b2_ref, w3_ref, b3_ref, o_ref):
    # fc_1 + ReLU: MXU matmul in the compute dtype, f32 accumulation;
    # bias add / ReLU on the VPU in f32.
    x = x_ref[...].astype(w1_ref.dtype)                  # (TB, dim)
    h1 = jnp.dot(x, w1_ref[...], preferred_element_type=jnp.float32)
    h1 = jnp.maximum(h1 + b1_ref[...], 0.0)              # (TB, P1) f32
    # dropout (eval) -> identity

    # fc_2 + ReLU (largest padded matmul: TBx128x128 -> feed compute dtype).
    h2 = jnp.dot(h1.astype(w2_ref.dtype), w2_ref[...],
                 preferred_element_type=jnp.float32)
    h2 = jnp.maximum(h2 + b2_ref[...], 0.0)              # (TB, P2) f32
    # dropout (eval) -> identity

    # fc_3: (TB, P2) @ (P2, 1) column -> (TB, 1).  Keeps the big h2 tile in
    # its natural layout (no transpose/relayout); the narrow output store is
    # only tb*4 bytes/step.
    out = jnp.dot(h2.astype(w3_ref.dtype), w3_ref[...],
                  preferred_element_type=jnp.float32)    # (TB, 1)
    o_ref[...] = (out + b3_ref[...]).astype(o_ref.dtype)


def mlp_forward(x, padded_params, *, block_rows=8192, compute_dtype=None):
    """x: (B, dim). padded_params from pad_params(). Returns (B,) float32.

    compute_dtype: dtype fed to the MXU for all three matmuls (weights +
    activations).  Defaults to x.dtype.  Accumulation is always f32.
    """
    w1, b1, w2, b2, w3, b3 = padded_params
    B, dim = x.shape

    x_dt = jnp.dtype(x.dtype)
    cdtype = jnp.dtype(compute_dtype) if compute_dtype is not None else x_dt

    # Weights are tiny; cast once on the host to the MXU-input dtype.
    w1 = w1.astype(cdtype)
    w2 = w2.astype(cdtype)
    w3 = w3.astype(cdtype)

    # Batch tile: as large as VMEM comfortably allows, multiple of 8 sublanes.
    tb = min(block_rows, _round_up(B, 8))
    tb = max(8, _round_up(tb, 8))
    # Clamp so the footprint stays well inside v7x's 64 MiB VMEM as well.
    while tb > 512 and _vmem_bytes(tb, dim, x_dt.itemsize, cdtype.itemsize) > (44 << 20):
        tb = _round_up(tb // 2, 8)
    num_tiles = pl.cdiv(B, tb)

    vmem_needed = _vmem_bytes(tb, dim, x_dt.itemsize, cdtype.itemsize)
    vmem_limit = int(min(60 << 20, max(32 << 20, vmem_needed + (8 << 20))))

    # NOTE: if a production `dim` is larger than 128 and not 128-aligned, pad
    # x's feature dim (and w1's rows) once at the producer; for dim <= 128 a
    # full-extent block is already legal and padding would inflate the
    # dominant HBM stream.

    const = lambda shape: pl.BlockSpec(shape, lambda i, _s=shape: tuple(0 for _ in _s))

    cost = pl.CostEstimate(
        flops=2 * B * (dim * H1 + H1 * H2 + H2),
        transcendentals=0,
        bytes_accessed=(B * dim * x_dt.itemsize            # x read (no pad copy)
                        + B * 4                             # output write
                        + (w1.size + w2.size + w3.size) * cdtype.itemsize
                        + (b1.size + b2.size + b3.size) * 4),
    )

    out = pl.pallas_call(
        _mlp_kernel,
        out_shape=jax.ShapeDtypeStruct((B, 1), jnp.float32),
        grid=(num_tiles,),
        in_specs=[
            pl.BlockSpec((tb, dim), lambda i: (i, 0)),      # x: streamed per tile
            const((dim, P1)), const((1, P1)),               # fc_1 (VMEM-resident)
            const((P1, P2)), const((1, P2)),                # fc_2
            const((P2, 1)), const((1, 1)),                  # fc_3 (column layout)
        ],
        out_specs=pl.BlockSpec((tb, 1), lambda i: (i, 0)),
        compiler_params=pltpu.CompilerParams(
            dimension_semantics=("parallel",),
            vmem_limit_bytes=vmem_limit),
        cost_estimate=cost,
    )(x, w1, b1, w2, b2, w3, b3)

    return out[:, 0]


def init_params(key, dim):
    """Torch-like Linear init; weights stored transposed as (in, out)."""
    ks = jax.random.split(key, 6)

    def linear(kw, kb, fan_in, fan_out):
        bound = fan_in ** -0.5
        w = jax.random.uniform(kw, (fan_in, fan_out), jnp.float32, -bound, bound)
        b = jax.random.uniform(kb, (fan_out,), jnp.float32, -bound, bound)
        return w, b

    w1, b1 = linear(ks[0], ks[1], dim, H1)
    w2, b2 = linear(ks[2], ks[3], H1, H2)
    w3, b3 = linear(ks[4], ks[5], H2, 1)
    return (w1, b1, w2, b2, w3, b3)


def pad_params(params):
    """Zero-pad hidden lane dims to 128 once; fc_3 weight stored as (P2, 1) column."""
    w1, b1, w2, b2, w3, b3 = params
    w1p = jnp.pad(w1, ((0, 0), (0, P1 - H1)))
    b1p = jnp.pad(b1.reshape(1, H1), ((0, 0), (0, P1 - H1)))
    w2p = jnp.pad(w2, ((0, P1 - H1), (0, P2 - H2)))
    b2p = jnp.pad(b2.reshape(1, H2), ((0, 0), (0, P2 - H2)))
    w3c = jnp.pad(w3.reshape(H2, 1), ((0, P2 - H2), (0, 0)))   # (P2, 1) column
    b3p = b3.reshape(1, 1)
    return (w1p, b1p, w2p, b2p, w3c, b3p)


def _reference(x, params):
    w1, b1, w2, b2, w3, b3 = params
    h1 = jnp.maximum(x @ w1 + b1, 0.0)
    h2 = jnp.maximum(h1 @ w2 + b2, 0.0)
    return (h2 @ w3 + b3)[:, 0]


if __name__ == "__main__":
    key = jax.random.PRNGKey(0)
    kx, kp, kx2 = jax.random.split(key, 3)

    dim = 32
    raw = init_params(kp, dim)
    padded = pad_params(raw)

    # Small batch: single tile.
    x = jax.random.normal(kx, (8, dim), dtype=jnp.float32)
    y = mlp_forward(x, padded)
    jax.block_until_ready(y)
    y_ref = _reference(x, raw)
    assert y.shape == (8,), y.shape
    assert jnp.allclose(y, y_ref, atol=1e-4, rtol=1e-4), "f32 small-batch mismatch"

    # Multi-tile grid with a ragged tail (exercises boundary blocks; no host pad).
    x2 = jax.random.normal(kx2, (300, dim), dtype=jnp.float32)
    y2 = mlp_forward(x2, padded, block_rows=128)
    jax.block_until_ready(y2)
    y2_ref = _reference(x2, raw)
    assert y2.shape == (300,), y2.shape
    assert jnp.allclose(y2, y2_ref, atol=1e-4, rtol=1e-4), "f32 tiled mismatch"

    # bf16 MXU inputs with f32 storage/accumulation (compute_dtype override).
    y3 = mlp_forward(x2, padded, block_rows=128, compute_dtype=jnp.bfloat16)
    jax.block_until_ready(y3)
    assert y3.shape == (300,), y3.shape
    assert jnp.allclose(y3, y2_ref, atol=1e-1, rtol=1e-1), "bf16-compute mismatch"

    # bf16 storage end-to-end (halves the dominant HBM stream on v6e/v7x).
    y4 = mlp_forward(x2.astype(jnp.bfloat16), padded, block_rows=128)
    jax.block_until_ready(y4)
    assert y4.shape == (300,), y4.shape
    assert jnp.allclose(y4, y2_ref, atol=1e-1, rtol=1e-1), "bf16 storage mismatch"

    print("KERNEL_OK")
</pallas_src>

<mosaic_0001>
module attributes {stable_mosaic.version = 11 : i64} {
  func.func @_mlp_kernel(%arg0: i32, %arg1: memref<8x32xf32, #tpu.memory_space<vmem>>, %arg2: memref<32x128xf32, #tpu.memory_space<vmem>>, %arg3: memref<1x128xf32, #tpu.memory_space<vmem>>, %arg4: memref<128x128xf32, #tpu.memory_space<vmem>>, %arg5: memref<1x128xf32, #tpu.memory_space<vmem>>, %arg6: memref<128x1xf32, #tpu.memory_space<vmem>>, %arg7: memref<1x1xf32, #tpu.memory_space<vmem>>, %arg8: memref<8x1xf32, #tpu.memory_space<vmem>>) attributes {dimension_semantics = [#tpu.dimension_semantics<parallel>], iteration_bounds = array<i64: 1>, scalar_prefetch = 0 : i64, scratch_operands = 0 : i64, tpu.core_type = #tpu.core_type<tc>, window_params = [{transform_indices = @transform_0, window_bounds = array<i64: 8, 32>}, {pipeline_mode = #tpu.pipeline_mode<synchronous>, transform_indices = @transform_1, window_bounds = array<i64: 32, 128>}, {pipeline_mode = #tpu.pipeline_mode<synchronous>, transform_indices = @transform_2, window_bounds = array<i64: 1, 128>}, {pipeline_mode = #tpu.pipeline_mode<synchronous>, transform_indices = @transform_3, window_bounds = array<i64: 128, 128>}, {pipeline_mode = #tpu.pipeline_mode<synchronous>, transform_indices = @transform_4, window_bounds = array<i64: 1, 128>}, {pipeline_mode = #tpu.pipeline_mode<synchronous>, transform_indices = @transform_5, window_bounds = array<i64: 128, 1>}, {pipeline_mode = #tpu.pipeline_mode<synchronous>, transform_indices = @transform_6, window_bounds = array<i64: 1, 1>}, {transform_indices = @transform_7, window_bounds = array<i64: 8, 1>}]} {
    %c0 = arith.constant 0 : index
    %c0_0 = arith.constant 0 : index
    %0 = vector.load %arg1[%c0, %c0_0] : memref<8x32xf32, #tpu.memory_space<vmem>>, vector<8x32xf32>
    %c0_1 = arith.constant 0 : index
    %c0_2 = arith.constant 0 : index
    %1 = vector.load %arg2[%c0_1, %c0_2] : memref<32x128xf32, #tpu.memory_space<vmem>>, vector<32x128xf32>
    %cst = arith.constant dense<0.000000e+00> : vector<8x128xf32>
    %2 = tpu.matmul %0, %1, %cst {dimension_numbers = #tpu.dot_dimension_numbers<[1], [0], [0], [1], [0, 0, 1, 1], [], []>} : vector<8x32xf32>, vector<32x128xf32>, vector<8x128xf32> -> vector<8x128xf32>
    %c0_3 = arith.constant 0 : index
    %c0_4 = arith.constant 0 : index
    %3 = vector.load %arg3[%c0_3, %c0_4] : memref<1x128xf32, #tpu.memory_space<vmem>>, vector<1x128xf32>
    %4 = vector.broadcast %3 : vector<1x128xf32> to vector<8x128xf32>
    %5 = arith.addf %2, %4 : vector<8x128xf32>
    %cst_5 = arith.constant 0.000000e+00 : f32
    %6 = vector.broadcast %cst_5 : f32 to vector<8x128xf32>
    %7 = arith.maximumf %5, %6 : vector<8x128xf32>
    %c0_6 = arith.constant 0 : index
    %c0_7 = arith.constant 0 : index
    %8 = vector.load %arg4[%c0_6, %c0_7] : memref<128x128xf32, #tpu.memory_space<vmem>>, vector<128x128xf32>
    %cst_8 = arith.constant dense<0.000000e+00> : vector<8x128xf32>
    %9 = tpu.matmul %7, %8, %cst_8 {dimension_numbers = #tpu.dot_dimension_numbers<[1], [0], [0], [1], [0, 0, 1, 1], [], []>} : vector<8x128xf32>, vector<128x128xf32>, vector<8x128xf32> -> vector<8x128xf32>
    %c0_9 = arith.constant 0 : index
    %c0_10 = arith.constant 0 : index
    %10 = vector.load %arg5[%c0_9, %c0_10] : memref<1x128xf32, #tpu.memory_space<vmem>>, vector<1x128xf32>
    %11 = vector.broadcast %10 : vector<1x128xf32> to vector<8x128xf32>
    %12 = arith.addf %9, %11 : vector<8x128xf32>
    %cst_11 = arith.constant 0.000000e+00 : f32
    %13 = vector.broadcast %cst_11 : f32 to vector<8x128xf32>
    %14 = arith.maximumf %12, %13 : vector<8x128xf32>
    %c0_12 = arith.constant 0 : index
    %c0_13 = arith.constant 0 : index
    %15 = vector.load %arg6[%c0_12, %c0_13] : memref<128x1xf32, #tpu.memory_space<vmem>>, vector<128x1xf32>
    %cst_14 = arith.constant dense<0.000000e+00> : vector<8x1xf32>
    %16 = tpu.matmul %14, %15, %cst_14 {dimension_numbers = #tpu.dot_dimension_numbers<[1], [0], [0], [1], [0, 0, 1, 1], [], []>} : vector<8x128xf32>, vector<128x1xf32>, vector<8x1xf32> -> vector<8x1xf32>
    %c0_15 = arith.constant 0 : index
    %c0_16 = arith.constant 0 : index
    %17 = vector.load %arg7[%c0_15, %c0_16] : memref<1x1xf32, #tpu.memory_space<vmem>>, vector<1x1xf32>
    %18 = vector.broadcast %17 : vector<1x1xf32> to vector<8x1xf32>
    %19 = arith.addf %16, %18 : vector<8x1xf32>
    %c0_17 = arith.constant 0 : index
    %c0_18 = arith.constant 0 : index
    %20 = vector.load %arg8[%c0_17, %c0_18] : memref<8x1xf32, #tpu.memory_space<vmem>>, vector<8x1xf32>
    tpu.vector_store %arg8[%c0_17, %c0_18], %19 {strides = array<i32>} : memref<8x1xf32, #tpu.memory_space<vmem>>, vector<8x1xf32>,
    return
  }
  func.func @transform_0(%arg0: i32) -> (i32, i32) {
    %c0_i32 = arith.constant 0 : i32
    %c0_i32_0 = arith.constant 0 : i32
    return %arg0, %c0_i32 : i32, i32
  }
  func.func @transform_1(%arg0: i32) -> (i32, i32) {
    %c0_i32 = arith.constant 0 : i32
    %c0_i32_0 = arith.constant 0 : i32
    %c0_i32_1 = arith.constant 0 : i32
    return %c0_i32, %c0_i32_0 : i32, i32
  }
  func.func @transform_2(%arg0: i32) -> (i32, i32) {
    %c0_i32 = arith.constant 0 : i32
    %c0_i32_0 = arith.constant 0 : i32
    %c0_i32_1 = arith.constant 0 : i32
    return %c0_i32, %c0_i32_0 : i32, i32
  }
  func.func @transform_3(%arg0: i32) -> (i32, i32) {
    %c0_i32 = arith.constant 0 : i32
    %c0_i32_0 = arith.constant 0 : i32
    %c0_i32_1 = arith.constant 0 : i32
    return %c0_i32, %c0_i32_0 : i32, i32
  }
  func.func @transform_4(%arg0: i32) -> (i32, i32) {
    %c0_i32 = arith.constant 0 : i32
    %c0_i32_0 = arith.constant 0 : i32
    %c0_i32_1 = arith.constant 0 : i32
    return %c0_i32, %c0_i32_0 : i32, i32
  }
  func.func @transform_5(%arg0: i32) -> (i32, i32) {
    %c0_i32 = arith.constant 0 : i32
    %c0_i32_0 = arith.constant 0 : i32
    %c0_i32_1 = arith.constant 0 : i32
    return %c0_i32, %c0_i32_0 : i32, i32
  }
  func.func @transform_6(%arg0: i32) -> (i32, i32) {
    %c0_i32 = arith.constant 0 : i32
    %c0_i32_0 = arith.constant 0 : i32
    %c0_i32_1 = arith.constant 0 : i32
    return %c0_i32, %c0_i32_0 : i32, i32
  }
  func.func @transform_7(%arg0: i32) -> (i32, i32) {
    %c0_i32 = arith.constant 0 : i32
    %c0_i32_0 = arith.constant 0 : i32
    return %arg0, %c0_i32 : i32, i32
  }
}

</mosaic_0001>

<llo_original>
// kernel: tpu_custom_call.1
$region0: #{tpu_custom_call.1}
  #allocation0 [shape = 'u32[]', space=smem, size = 0x4, offset = 0x4, fixed_abs, tag = 'smem constant byte address 0x4 - core index']
  #allocation1 [shape = 'u32[144,128]{1,0:T(1,128)}', space=vmem, size = 0x12000, scoped, tag = 'internal scratch']
  #allocation2 [shape = 'f32[1,1]{1,0:T(1,128)S(1)}', space=vmem, size = 0x200, scoped, tag = 'scoped memory for tpu_custom_call.1']
  %s0 = inlined_call_operand.vmem [shape: f32[8,32], index: 0, kind: input, shape index: {}]
  %s1 = inlined_call_operand.hbm [shape: f32[32,128], index: 1, kind: input, shape index: {}]
  %s2 = inlined_call_operand.hbm [shape: f32[1,128], index: 2, kind: input, shape index: {}]
  %s3 = inlined_call_operand.vmem [shape: f32[128,128], index: 3, kind: input, shape index: {}]
  %s4 = inlined_call_operand.vmem [shape: f32[1,128], index: 4, kind: input, shape index: {}]
  %s5 = inlined_call_operand.vmem [shape: f32[128,1], index: 5, kind: input, shape index: {}]
  %s6 = inlined_call_operand.<no memory space> [shape: f32[1,1], index: 6, kind: input, shape index: {}]
  %s7 = inlined_call_operand.vmem [shape: f32[8,1], index: 7, kind: output, shape index: {}]
  %s8 = sld [smem:[#allocation0]]
  $region46: #{tpu_custom_call.1} parent=0
    _
  %s10 = ssub.s32 1, %s8
  %s11 = scalar_select 0, %s10, %s8
  %v12 = vstv %s6
  %13 = vst [vmem:[#allocation2] sm:$0x1] %v12
  $region1: #{tpu_custom_call.1} parent=0
    #allocation3 [shape = 'u8[16384]{0}', space=vmem, size = 0x4000, scoped, tag = 'input window, operand 1, single buffered']
    #allocation4 [shape = 's32[1]{0}', space=sflag, size = 0x4, scoped, tag = 'scoped memory for tpu_custom_call.1']
    #allocation5 [shape = 'u8[512]{0}', space=vmem, size = 0x400, scoped, tag = 'input window, operand 2, single buffered']
    #allocation6 [shape = 's32[1]{0}', space=sflag, size = 0x4, scoped, tag = 'scoped memory for tpu_custom_call.1']
    %14 = vsyncpa [#allocation4], 0
    %15 = vsyncpa [#allocation6], 0
    // Predicated region
    $region2: #{tpu_custom_call.1} parent=1 // pred_check
      _
    $region3: #{tpu_custom_call.1} parent=1 // pred_check_branch
      %17 = sbr.rel (0) target = $region5
    $region4: #{tpu_custom_call.1} parent=1 // pred_region
      _
    $region5: #{tpu_custom_call.1} parent=1 // pred_fallthru
      _
    // Predicated region
    $region6: #{tpu_custom_call.1} parent=1 // pred_check
      _
    $region7: #{tpu_custom_call.1} parent=1 // pred_check_branch
      %19 = sbr.rel (0) target = $region9
    $region8: #{tpu_custom_call.1} parent=1 // pred_region
      %s21 = ssub.s32 512, 512
      %22 = vsyncadd [#allocation4], %s21
      %s23 = sshll.u32 [#allocation3], 4
      %s24 = int_to_ptr.vmem [resolvable:$true] %s23
      %29 = dma.hbm_to_vmem [thread:$0]  %s1, 512, %s24, [#allocation4], 128, 128, 8
    $region9: #{tpu_custom_call.1} parent=1 // pred_fallthru
      _
    // Predicated region
    $region10: #{tpu_custom_call.1} parent=1 // pred_check
      _
    $region11: #{tpu_custom_call.1} parent=1 // pred_check_branch
      %31 = sbr.rel (0) target = $region13
    $region12: #{tpu_custom_call.1} parent=1 // pred_region
      %s33 = ssub.s32 16, 16
      %34 = vsyncadd [#allocation6], %s33
      %s36 = sshll.u32 [#allocation5], 4
      %s37 = int_to_ptr.vmem [resolvable:$true] %s36
      %39 = dma.hbm_to_vmem [thread:$0]  %s2, 16, %s37, [#allocation6]
    $region13: #{tpu_custom_call.1} parent=1 // pred_fallthru
      _
    // Predicated region
    $region14: #{tpu_custom_call.1} parent=1 // pred_check
      _
    $region15: #{tpu_custom_call.1} parent=1 // pred_check_branch
      %41 = sbr.rel (0) target = $region17
    $region16: #{tpu_custom_call.1} parent=1 // pred_region
      _
    $region17: #{tpu_custom_call.1} parent=1 // pred_fallthru
      _
    // Predicated region
    $region18: #{tpu_custom_call.1} parent=1 // pred_check
      _
    $region19: #{tpu_custom_call.1} parent=1 // pred_check_branch
      %43 = sbr.rel (0) target = $region21
    $region20: #{tpu_custom_call.1} parent=1 // pred_region
      _
    $region21: #{tpu_custom_call.1} parent=1 // pred_fallthru
      _
    // Predicated region
    $region22: #{tpu_custom_call.1} parent=1 // pred_check
      _
    $region23: #{tpu_custom_call.1} parent=1 // pred_check_branch
      %45 = sbr.rel (0) target = $region25
    $region24: #{tpu_custom_call.1} parent=1 // pred_region
      _
    $region25: #{tpu_custom_call.1} parent=1 // pred_fallthru
      _
    // Predicated region
    $region26: #{tpu_custom_call.1} parent=1 // pred_check
      _
    $region27: #{tpu_custom_call.1} parent=1 // pred_check_branch
      %47 = sbr.rel (0) target = $region29
    $region28: #{tpu_custom_call.1} parent=1 // pred_region
      _
    $region29: #{tpu_custom_call.1} parent=1 // pred_fallthru
      _
    // Predicated region
    $region30: #{tpu_custom_call.1} parent=1 // pred_check
      _
    $region31: #{tpu_custom_call.1} parent=1 // pred_check_branch
      %49 = sbr.rel (0) target = $region33
    $region32: #{tpu_custom_call.1} parent=1 // pred_region
      %50 = dma.done [#allocation4], 512
    $region33: #{tpu_custom_call.1} parent=1 // pred_fallthru
      _
    // Predicated region
    $region34: #{tpu_custom_call.1} parent=1 // pred_check
      _
    $region35: #{tpu_custom_call.1} parent=1 // pred_check_branch
      %52 = sbr.rel (0) target = $region37
    $region36: #{tpu_custom_call.1} parent=1 // pred_region
      %53 = dma.done [#allocation6], 16
    $region37: #{tpu_custom_call.1} parent=1 // pred_fallthru
      _
    %v54 = vld [vmem:[%s0] sm:$0xff]
    %v55 = vld [vmem:[#allocation3] sm:$0xff]
    %v56 = vld [vmem:[#allocation3 + $0x8] sm:$0xff]
    %v57 = vld [vmem:[#allocation3 + $0x10] sm:$0xff]
    %v58 = vld [vmem:[#allocation3 + $0x18] sm:$0xff]
    %v59 = vld [vmem:[#allocation5] sm:$0x1]
    %v61 = vlaneseq
    %v62 = vshrl.u32 %v61, 7
    %v63 = vsub.s32 0, %v62
    %v64 = vrot.slane %v59, %v63
    %vm66 = vcmask 261120
    %v68 = vsel %vm66, %v54, 0
    %70 = vmatprep.subr.mxu0 0.0
    %71 = vmatpush1.msra.mxu0 0.0
    %72 = vmatprep.subr.mxu0 0.0
    %73 = vmatpush1.msra.mxu0 0.0
    %74 = vmatprep.subr.mxu0 0.0
    %75 = vmatpush1.msra.mxu0 0.0
    %76 = vmatprep.subr.mxu0 0.0
    %77 = vmatpush1.msra.mxu0 0.0
    %78 = vmatprep.subr.mxu0 0.0
    %79 = vmatpush1.msra.mxu0 0.0
    %80 = vmatprep.subr.mxu0 0.0
    %81 = vmatpush1.msra.mxu0 0.0
    %82 = vmatprep.subr.mxu0 0.0
    %83 = vmatpush1.msra.mxu0 0.0
    %84 = vmatprep.subr.mxu0 0.0
    %85 = vmatpush1.msra.mxu0 0.0
    %86 = vmatprep.subr.mxu0 0.0
    %87 = vmatpush1.msra.mxu0 0.0
    %88 = vmatprep.subr.mxu0 0.0
    %89 = vmatpush1.msra.mxu0 0.0
    %90 = vmatprep.subr.mxu0 0.0
    %91 = vmatpush1.msra.mxu0 0.0
    %92 = vmatprep.subr.mxu0 0.0
    %93 = vmatpush1.msra.mxu0 0.0
    %94 = vmatprep.subr.mxu0 0.0
    %95 = vmatpush1.msra.mxu0 %v58
    %96 = vmatprep.subr.mxu0 0.0
    %97 = vmatpush1.msra.mxu0 %v57
    %98 = vmatprep.subr.mxu0 0.0
    %99 = vmatpush1.msra.mxu0 %v56
    %100 = vmatprep.subr.mxu0 0.0
    %101 = vmatpush1.msra.mxu0 %v55
    %102 = vmatprep.subr.mxu0 0.0
    %103 = vmatpush2.msra.mxu0 0.0
    %104 = vmatprep.subr.mxu0 0.0
    %105 = vmatpush2.msra.mxu0 0.0
    %106 = vmatprep.subr.mxu0 0.0
    %107 = vmatpush2.msra.mxu0 0.0
    %108 = vmatprep.subr.mxu0 0.0
    %109 = vmatpush2.msra.mxu0 0.0
    %110 = vmatprep.subr.mxu0 0.0
    %111 = vmatpush2.msra.mxu0 0.0
    %112 = vmatprep.subr.mxu0 0.0
    %113 = vmatpush2.msra.mxu0 0.0
    %114 = vmatprep.subr.mxu0 0.0
    %115 = vmatpush2.msra.mxu0 0.0
    %116 = vmatprep.subr.mxu0 0.0
    %117 = vmatpush2.msra.mxu0 0.0
    %118 = vmatprep.subr.mxu0 0.0
    %119 = vmatpush2.msra.mxu0 0.0
    %120 = vmatprep.subr.mxu0 0.0
    %121 = vmatpush2.msra.mxu0 0.0
    %122 = vmatprep.subr.mxu0 0.0
    %123 = vmatpush2.msra.mxu0 0.0
    %124 = vmatprep.subr.mxu0 0.0
    %125 = vmatpush2.msra.mxu0 0.0
    %126 = vmatprep.subr.mxu0 0.0
    %127 = vmatpush2.msra.mxu0 0.0
    %128 = vmatprep.subr.mxu0 0.0
    %129 = vmatpush2.msra.mxu0 0.0
    %130 = vmatprep.subr.mxu0 0.0
    %131 = vmatpush2.msra.mxu0 0.0
    %132 = vmatprep.subr.mxu0 0.0
    %133 = vmatpush2.msra.mxu0 0.0
    %134 = vmatprep.mubr.f32.mxu0 0.0
    %135 = vmatmul.mubr.f32.gmra.mxu0 %v68
    %v136 = vpop.f32.mrf.mxu0
    %v137 = vadd.f32 %v64, %v136
    %v138 = vpop.f32.mrf.mxu0
    %139 = vdwg.mxu0
    %v140 = vmax.f32 %v137, 0.0
    %v141 = vld [vmem:[%s3] sm:$0xff]
    %v142 = vld [vmem:[%s3 + $0x8] sm:$0xff]
    %v143 = vld [vmem:[%s3 + $0x10] sm:$0xff]
    %v144 = vld [vmem:[%s3 + $0x18] sm:$0xff]
    %v145 = vld [vmem:[%s3 + $0x20] sm:$0xff]
    %v146 = vld [vmem:[%s3 + $0x28] sm:$0xff]
    %v147 = vld [vmem:[%s3 + $0x30] sm:$0xff]
    %v148 = vld [vmem:[%s3 + $0x38] sm:$0xff]
    %v149 = vld [vmem:[%s3 + $0x40] sm:$0xff]
    %v150 = vld [vmem:[%s3 + $0x48] sm:$0xff]
    %v151 = vld [vmem:[%s3 + $0x50] sm:$0xff]
    %v152 = vld [vmem:[%s3 + $0x58] sm:$0xff]
    %v153 = vld [vmem:[%s3 + $0x60] sm:$0xff]
    %v154 = vld [vmem:[%s3 + $0x68] sm:$0xff]
    %v155 = vld [vmem:[%s3 + $0x70] sm:$0xff]
    %v156 = vld [vmem:[%s3 + $0x78] sm:$0xff]
    %v157 = vld [vmem:[%s4] sm:$0x1]
    %v159 = vlaneseq
    %v160 = vshrl.u32 %v159, 7
    %v161 = vsub.s32 0, %v160
    %v162 = vrot.slane %v157, %v161
    %164 = vmatprep.subr.mxu0 0.0
    %165 = vmatpush1.msra.mxu0 %v156
    %166 = vmatprep.subr.mxu0 0.0
    %167 = vmatpush1.msra.mxu0 %v155
    %168 = vmatprep.subr.mxu0 0.0
    %169 = vmatpush1.msra.mxu0 %v154
    %170 = vmatprep.subr.mxu0 0.0
    %171 = vmatpush1.msra.mxu0 %v153
    %172 = vmatprep.subr.mxu0 0.0
    %173 = vmatpush1.msra.mxu0 %v152
    %174 = vmatprep.subr.mxu0 0.0
    %175 = vmatpush1.msra.mxu0 %v151
    %176 = vmatprep.subr.mxu0 0.0
    %177 = vmatpush1.msra.mxu0 %v150
    %178 = vmatprep.subr.mxu0 0.0
    %179 = vmatpush1.msra.mxu0 %v149
    %180 = vmatprep.subr.mxu0 0.0
    %181 = vmatpush1.msra.mxu0 %v148
    %182 = vmatprep.subr.mxu0 0.0
    %183 = vmatpush1.msra.mxu0 %v147
    %184 = vmatprep.subr.mxu0 0.0
    %185 = vmatpush1.msra.mxu0 %v146
    %186 = vmatprep.subr.mxu0 0.0
    %187 = vmatpush1.msra.mxu0 %v145
    %188 = vmatprep.subr.mxu0 0.0
    %189 = vmatpush1.msra.mxu0 %v144
    %190 = vmatprep.subr.mxu0 0.0
    %191 = vmatpush1.msra.mxu0 %v143
    %192 = vmatprep.subr.mxu0 0.0
    %193 = vmatpush1.msra.mxu0 %v142
    %194 = vmatprep.subr.mxu0 0.0
    %195 = vmatpush1.msra.mxu0 %v141
    %196 = vmatprep.subr.mxu0 0.0
    %197 = vmatpush2.msra.mxu0 0.0
    %198 = vmatprep.subr.mxu0 0.0
    %199 = vmatpush2.msra.mxu0 0.0
    %200 = vmatprep.subr.mxu0 0.0
    %201 = vmatpush2.msra.mxu0 0.0
    %202 = vmatprep.subr.mxu0 0.0
    %203 = vmatpush2.msra.mxu0 0.0
    %204 = vmatprep.subr.mxu0 0.0
    %205 = vmatpush2.msra.mxu0 0.0
    %206 = vmatprep.subr.mxu0 0.0
    %207 = vmatpush2.msra.mxu0 0.0
    %208 = vmatprep.subr.mxu0 0.0
    %209 = vmatpush2.msra.mxu0 0.0
    %210 = vmatprep.subr.mxu0 0.0
    %211 = vmatpush2.msra.mxu0 0.0
    %212 = vmatprep.subr.mxu0 0.0
    %213 = vmatpush2.msra.mxu0 0.0
    %214 = vmatprep.subr.mxu0 0.0
    %215 = vmatpush2.msra.mxu0 0.0
    %216 = vmatprep.subr.mxu0 0.0
    %217 = vmatpush2.msra.mxu0 0.0
    %218 = vmatprep.subr.mxu0 0.0
    %219 = vmatpush2.msra.mxu0 0.0
    %220 = vmatprep.subr.mxu0 0.0
    %221 = vmatpush2.msra.mxu0 0.0
    %222 = vmatprep.subr.mxu0 0.0
    %223 = vmatpush2.msra.mxu0 0.0
    %224 = vmatprep.subr.mxu0 0.0
    %225 = vmatpush2.msra.mxu0 0.0
    %226 = vmatprep.subr.mxu0 0.0
    %227 = vmatpush2.msra.mxu0 0.0
    %228 = vmatprep.mubr.f32.mxu0 0.0
    %229 = vmatmul.mubr.f32.gmra.mxu0 %v140
    %v230 = vpop.f32.mrf.mxu0
    %v231 = vadd.f32 %v162, %v230
    %v232 = vpop.f32.mrf.mxu0
    %233 = vdwg.mxu0
    %v234 = vmax.f32 %v231, 0.0
    %v235 = vld [vmem:[%s5] sm:$0xff]
    %v236 = vld [vmem:[%s5 + $0x8] sm:$0xff]
    %v237 = vld [vmem:[%s5 + $0x10] sm:$0xff]
    %v238 = vld [vmem:[%s5 + $0x18] sm:$0xff]
    %v239 = vld [vmem:[%s5 + $0x20] sm:$0xff]
    %v240 = vld [vmem:[%s5 + $0x28] sm:$0xff]
    %v241 = vld [vmem:[%s5 + $0x30] sm:$0xff]
    %v242 = vld [vmem:[%s5 + $0x38] sm:$0xff]
    %v243 = vld [vmem:[%s5 + $0x40] sm:$0xff]
    %v244 = vld [vmem:[%s5 + $0x48] sm:$0xff]
    %v245 = vld [vmem:[%s5 + $0x50] sm:$0xff]
    %v246 = vld [vmem:[%s5 + $0x58] sm:$0xff]
    %v247 = vld [vmem:[%s5 + $0x60] sm:$0xff]
    %v248 = vld [vmem:[%s5 + $0x68] sm:$0xff]
    %v249 = vld [vmem:[%s5 + $0x70] sm:$0xff]
    %v250 = vld [vmem:[%s5 + $0x78] sm:$0xff]
    %v251 = vld [vmem:[#allocation2] sm:$0x1]
    %v253 = vlaneseq
    %v254 = vshrl.u32 %v253, 7
    %v255 = vsub.s32 0, %v254
    %v256 = vrot.slane %v251, %v255
    %258 = vmatprep.subr.mxu0 0.0
    %259 = vmatpush1.msra.mxu0 %v250
    %260 = vmatprep.subr.mxu0 0.0
    %261 = vmatpush1.msra.mxu0 %v249
    %262 = vmatprep.subr.mxu0 0.0
    %263 = vmatpush1.msra.mxu0 %v248
    %264 = vmatprep.subr.mxu0 0.0
    %265 = vmatpush1.msra.mxu0 %v247
    %266 = vmatprep.subr.mxu0 0.0
    %267 = vmatpush1.msra.mxu0 %v246
    %268 = vmatprep.subr.mxu0 0.0
    %269 = vmatpush1.msra.mxu0 %v245
    %270 = vmatprep.subr.mxu0 0.0
    %271 = vmatpush1.msra.mxu0 %v244
    %272 = vmatprep.subr.mxu0 0.0
    %273 = vmatpush1.msra.mxu0 %v243
    %274 = vmatprep.subr.mxu0 0.0
    %275 = vmatpush1.msra.mxu0 %v242
    %276 = vmatprep.subr.mxu0 0.0
    %277 = vmatpush1.msra.mxu0 %v241
    %278 = vmatprep.subr.mxu0 0.0
    %279 = vmatpush1.msra.mxu0 %v240
    %280 = vmatprep.subr.mxu0 0.0
    %281 = vmatpush1.msra.mxu0 %v239
    %282 = vmatprep.subr.mxu0 0.0
    %283 = vmatpush1.msra.mxu0 %v238
    %284 = vmatprep.subr.mxu0 0.0
    %285 = vmatpush1.msra.mxu0 %v237
    %286 = vmatprep.subr.mxu0 0.0
    %287 = vmatpush1.msra.mxu0 %v236
    %288 = vmatprep.subr.mxu0 0.0
    %289 = vmatpush1.msra.mxu0 %v235
    %290 = vmatprep.subr.mxu0 0.0
    %291 = vmatpush2.msra.mxu0 0.0
    %292 = vmatprep.subr.mxu0 0.0
    %293 = vmatpush2.msra.mxu0 0.0
    %294 = vmatprep.subr.mxu0 0.0
    %295 = vmatpush2.msra.mxu0 0.0
    %296 = vmatprep.subr.mxu0 0.0
    %297 = vmatpush2.msra.mxu0 0.0
    %298 = vmatprep.subr.mxu0 0.0
    %299 = vmatpush2.msra.mxu0 0.0
    %300 = vmatprep.subr.mxu0 0.0
    %301 = vmatpush2.msra.mxu0 0.0
    %302 = vmatprep.subr.mxu0 0.0
    %303 = vmatpush2.msra.mxu0 0.0
    %304 = vmatprep.subr.mxu0 0.0
    %305 = vmatpush2.msra.mxu0 0.0
    %306 = vmatprep.subr.mxu0 0.0
    %307 = vmatpush2.msra.mxu0 0.0
    %308 = vmatprep.subr.mxu0 0.0
    %309 = vmatpush2.msra.mxu0 0.0
    %310 = vmatprep.subr.mxu0 0.0
    %311 = vmatpush2.msra.mxu0 0.0
    %312 = vmatprep.subr.mxu0 0.0
    %313 = vmatpush2.msra.mxu0 0.0
    %314 = vmatprep.subr.mxu0 0.0
    %315 = vmatpush2.msra.mxu0 0.0
    %316 = vmatprep.subr.mxu0 0.0
    %317 = vmatpush2.msra.mxu0 0.0
    %318 = vmatprep.subr.mxu0 0.0
    %319 = vmatpush2.msra.mxu0 0.0
    %320 = vmatprep.subr.mxu0 0.0
    %321 = vmatpush2.msra.mxu0 0.0
    %322 = vmatprep.mubr.f32.mxu0 0.0
    %323 = vmatmul.mubr.f32.gmra.mxu0 %v234
    %v324 = vpop.f32.mrf.mxu0
    %v325 = vadd.f32 %v256, %v324
    %v326 = vpop.f32.mrf.mxu0
    %327 = vdwg.mxu0
    %vm328 = vcmask 7168
    %329 = vst.msk [vmem:[%s7] sm:$0xff] %vm328, %v325
    // Predicated region
    $region38: #{tpu_custom_call.1} parent=1 // pred_check
      _
    $region39: #{tpu_custom_call.1} parent=1 // pred_check_branch
      %331 = sbr.rel (0) target = $region41
    $region40: #{tpu_custom_call.1} parent=1 // pred_region
      _
    $region41: #{tpu_custom_call.1} parent=1 // pred_fallthru
      _
    // Predicated region
    $region42: #{tpu_custom_call.1} parent=1 // pred_check
      _
    $region43: #{tpu_custom_call.1} parent=1 // pred_check_branch
      %333 = sbr.rel (0) target = $region45
    $region44: #{tpu_custom_call.1} parent=1 // pred_region
      _
    $region45: #{tpu_custom_call.1} parent=1 // pred_fallthru
      _
    %334 = vsyncpa [#allocation4], 1
    %335 = vsyncpa [#allocation6], 1

</llo_original>
